<compile_context>
chip_gen: v6e
topology: v6e:2x2x1
jax: 0.10.0
libtpu: 0.0.40
codegen_flags: <defaults>
</compile_context>

<pallas_src>
import jax
import jax.numpy as jnp
from jax.experimental import pallas as pl
from jax.experimental.pallas import tpu as pltpu


def _round_up(n, m):
    return ((n + m - 1) // m) * m


def _linear_tanh_kernel(params_ref, x_ref, o_ref):
    # params_ref: SMEM [f_in + 1] f32 scalars (w0..w_{f_in-1}, bias), scalar-prefetched.
    # x_ref:      VMEM [f_in, TS, 128]  -- batch spread over sublane + lane axes.
    # o_ref:      VMEM [TS, 128]        -- dense output slab (unmasked stores).
    f_in = x_ref.shape[0]
    acc = params_ref[f_in] + params_ref[0] * x_ref[0]
    for f in range(1, f_in):  # unrolled at trace time (f_in = 3)
        acc = acc + params_ref[f] * x_ref[f]
    o_ref[...] = jnp.tanh(acc)  # tanh lands on the EUP (free slot vs VPU)


def simple_neural_network(x, weights, bias, *, ts_target=2048):
    """x: [B, 3] f32; weights: [1, 3] (torch Linear weight); bias: [1]. -> [B, 1]."""
    x = jnp.asarray(x, jnp.float32)
    w = jnp.asarray(weights, jnp.float32).reshape(-1)    # [F_in]
    b = jnp.asarray(bias, jnp.float32).reshape(-1)       # [F_out] == [1]

    B, f_in = x.shape
    params = jnp.concatenate([w, b])                      # [F_in + 1] scalars -> SMEM

    # Layout plumbing (single producer copy; XLA fuses pad into the transpose):
    # batch padded to a multiple of 128 lanes, then viewed as [F_in, R, 128].
    b_pad = _round_up(B, 128)
    x_p = x if b_pad == B else jnp.pad(x, ((0, b_pad - B), (0, 0)))
    r = b_pad // 128
    xt = x_p.T.reshape(f_in, r, 128)

    # Tile sizing: TS rows of 128 lanes per step.
    #   * big enough to amortize per-step overhead (target multi-MiB blocks),
    #   * multiple of 8 (sublane tiling) unless it equals the full dim,
    #   * >= 2 blocks when possible so the "parallel" axis shards across
    #     v7x's two TensorCores.
    if r < 16:
        ts = r                                   # single block == full dim (allowed)
    else:
        ts = min(ts_target, max(8, (r // 2) // 8 * 8))
    grid = (pl.cdiv(r, ts),)

    out = pl.pallas_call(
        _linear_tanh_kernel,
        out_shape=jax.ShapeDtypeStruct((r, 128), jnp.float32),
        grid_spec=pltpu.PrefetchScalarGridSpec(
            # 4 grid-invariant scalars land in SMEM once, before the grid runs.
            num_scalar_prefetch=1,
            grid=grid,
            in_specs=[
                # x tile: features resident, batch (sublane x lane) tiled.
                pl.BlockSpec((f_in, ts, 128), lambda i, params: (0, i, 0)),
            ],
            # Dense lane+sublane output block; ragged last block is write-clipped.
            out_specs=pl.BlockSpec((ts, 128), lambda i, params: (i, 0)),
        ),
        compiler_params=pltpu.CompilerParams(
            dimension_semantics=("parallel",),
        ),
    )(params, xt)

    # Back to torch layout [B, 1]; drop batch padding. No transpose needed.
    return out.reshape(-1)[:B].reshape(B, 1)

# TODO(synk): for tiny batches this standalone pallas_call is dispatch-bound;
# the real win there is fusing Linear+Tanh into a surrounding kernel.


if __name__ == "__main__":
    key = jax.random.PRNGKey(0)
    kx, kw, kb = jax.random.split(key, 3)

    # Deterministic "checkpoint": Linear(3, 1) weight [1, 3] and bias [1].
    weights = jax.random.normal(kw, (1, 3), dtype=jnp.float32)
    bias = jax.random.normal(kb, (1,), dtype=jnp.float32)

    # Small batch of inputs, feature dim = 3 as the module implies.
    x = jax.random.normal(kx, (8, 3), dtype=jnp.float32)

    out = simple_neural_network(x, weights, bias)
    out = jax.block_until_ready(out)

    # Correctness check against a plain-JAX reference of the torch forward.
    ref = jnp.tanh(x @ weights.T + bias[None, :])
    assert out.shape == (8, 1), out.shape
    assert jnp.allclose(out, ref, atol=1e-5, rtol=1e-5)

    print("KERNEL_OK")
</pallas_src>

<mosaic_0001>
module attributes {stable_mosaic.version = 11 : i64} {
  func.func @_linear_tanh_kernel(%arg0: i32, %arg1: memref<4xf32, #tpu.memory_space<smem>>, %arg2: memref<3x1x128xf32, #tpu.memory_space<vmem>>, %arg3: memref<1x128xf32, #tpu.memory_space<vmem>>) attributes {dimension_semantics = [#tpu.dimension_semantics<parallel>], iteration_bounds = array<i64: 1>, scalar_prefetch = 1 : i64, scratch_operands = 0 : i64, tpu.core_type = #tpu.core_type<tc>, window_params = [{transform_indices = @transform_0, window_bounds = array<i64: 3, 1, 128>}, {transform_indices = @transform_1, window_bounds = array<i64: 1, 128>}]} {
    %c3 = arith.constant 3 : index
    %0 = memref.load %arg1[%c3] : memref<4xf32, #tpu.memory_space<smem>>
    %c0 = arith.constant 0 : index
    %1 = memref.load %arg1[%c0] : memref<4xf32, #tpu.memory_space<smem>>
    %c0_0 = arith.constant 0 : index
    %c0_1 = arith.constant 0 : index
    %c0_2 = arith.constant 0 : index
    %2 = vector.load %arg2[%c0_0, %c0_1, %c0_2] : memref<3x1x128xf32, #tpu.memory_space<vmem>>, vector<1x1x128xf32>
    %3 = vector.shape_cast %2 : vector<1x1x128xf32> to vector<1x128xf32>
    %4 = vector.broadcast %1 : f32 to vector<1x128xf32>
    %5 = arith.mulf %4, %3 : vector<1x128xf32>
    %6 = vector.broadcast %0 : f32 to vector<1x128xf32>
    %7 = arith.addf %6, %5 : vector<1x128xf32>
    %c1 = arith.constant 1 : index
    %8 = memref.load %arg1[%c1] : memref<4xf32, #tpu.memory_space<smem>>
    %c1_3 = arith.constant 1 : index
    %c0_4 = arith.constant 0 : index
    %c0_5 = arith.constant 0 : index
    %9 = vector.load %arg2[%c1_3, %c0_4, %c0_5] : memref<3x1x128xf32, #tpu.memory_space<vmem>>, vector<1x1x128xf32>
    %10 = vector.shape_cast %9 : vector<1x1x128xf32> to vector<1x128xf32>
    %11 = vector.broadcast %8 : f32 to vector<1x128xf32>
    %12 = arith.mulf %11, %10 : vector<1x128xf32>
    %13 = arith.addf %7, %12 : vector<1x128xf32>
    %c2 = arith.constant 2 : index
    %14 = memref.load %arg1[%c2] : memref<4xf32, #tpu.memory_space<smem>>
    %c2_6 = arith.constant 2 : index
    %c0_7 = arith.constant 0 : index
    %c0_8 = arith.constant 0 : index
    %15 = vector.load %arg2[%c2_6, %c0_7, %c0_8] : memref<3x1x128xf32, #tpu.memory_space<vmem>>, vector<1x1x128xf32>
    %16 = vector.shape_cast %15 : vector<1x1x128xf32> to vector<1x128xf32>
    %17 = vector.broadcast %14 : f32 to vector<1x128xf32>
    %18 = arith.mulf %17, %16 : vector<1x128xf32>
    %19 = arith.addf %13, %18 : vector<1x128xf32>
    %20 = math.tanh %19 : vector<1x128xf32>
    %c0_9 = arith.constant 0 : index
    %c0_10 = arith.constant 0 : index
    %21 = vector.load %arg3[%c0_9, %c0_10] : memref<1x128xf32, #tpu.memory_space<vmem>>, vector<1x128xf32>
    tpu.vector_store %arg3[%c0_9, %c0_10], %20 {strides = array<i32>} : memref<1x128xf32, #tpu.memory_space<vmem>>, vector<1x128xf32>,
    return
  }
  func.func @transform_0(%arg0: i32, %arg1: memref<4xf32, #tpu.memory_space<smem>>) -> (i32, i32, i32) {
    %c0_i32 = arith.constant 0 : i32
    %c0_i32_0 = arith.constant 0 : i32
    %c0_i32_1 = arith.constant 0 : i32
    return %c0_i32, %arg0, %c0_i32_0 : i32, i32, i32
  }
  func.func @transform_1(%arg0: i32, %arg1: memref<4xf32, #tpu.memory_space<smem>>) -> (i32, i32) {
    %c0_i32 = arith.constant 0 : i32
    %c0_i32_0 = arith.constant 0 : i32
    return %arg0, %c0_i32 : i32, i32
  }
}

</mosaic_0001>

<llo_original>
// kernel: tpu_custom_call.1
$region0: #{tpu_custom_call.1}
  #allocation0 [shape = 'u32[]', space=smem, size = 0x4, offset = 0x4, fixed_abs, tag = 'smem constant byte address 0x4 - core index']
  #allocation1 [shape = 'u32[144,128]{1,0:T(1,128)}', space=vmem, size = 0x12000, scoped, tag = 'internal scratch']
  #allocation2 [shape = 's32[1]{0}', space=sflag, size = 0x4, scoped, tag = 'scoped memory for tpu_custom_call.1']
  #allocation3 [shape = 'u8[512]{0}', space=smem, size = 0x200, scoped, tag = 'prefetched SMEM operand 0']
  %s0 = inlined_call_operand.hbm [shape: f32[4], index: 0, kind: input, shape index: {}]
  %s1 = inlined_call_operand.hbm [shape: f32[3,1,128], index: 1, kind: input, shape index: {}]
  %s2 = inlined_call_operand.hbm [shape: f32[1,128], index: 2, kind: output, shape index: {}]
  %s3 = sld [smem:[#allocation0]]
  $region18: #{tpu_custom_call.1} parent=0
    _
  %s5 = ssub.s32 1, %s3
  %s6 = scalar_select 0, %s5, %s3
  %8 = dma.hbm_to_smem %s0, 16, [#allocation3], [#allocation2]
  %9 = dma.done [#allocation2], 16
  %10 = sfence
  $region1: #{tpu_custom_call.1} parent=0
    #allocation4 [shape = 'u8[1536]{0}', space=vmem, size = 0x800, scoped, tag = 'input window, operand 1, single buffered']
    #allocation5 [shape = 's32[1]{0}', space=sflag, size = 0x4, scoped, tag = 'scoped memory for tpu_custom_call.1']
    #allocation6 [shape = 's32[1]{0}', space=sflag, size = 0x4, scoped, tag = 'scoped memory for tpu_custom_call.1']
    #allocation7 [shape = 'u8[512]{0}', space=vmem, size = 0x400, scoped, tag = 'output window, operand 0, single buffered']
    %11 = vsyncpa [#allocation5], 0
    %12 = vsyncpa [#allocation6], 0
    // Predicated region
    $region2: #{tpu_custom_call.1} parent=1 // pred_check
      _
    $region3: #{tpu_custom_call.1} parent=1 // pred_check_branch
      %14 = sbr.rel (0) target = $region5
    $region4: #{tpu_custom_call.1} parent=1 // pred_region
      %s16 = ssub.s32 48, 48
      %17 = vsyncadd [#allocation5], %s16
      %s18 = sshll.u32 [#allocation4], 4
      %s19 = int_to_ptr.vmem [resolvable:$true] %s18
      %24 = dma.hbm_to_vmem [thread:$0]  %s1, 48, %s19, [#allocation5], 16, 16, 1
    $region5: #{tpu_custom_call.1} parent=1 // pred_fallthru
      _
    // Predicated region
    $region6: #{tpu_custom_call.1} parent=1 // pred_check
      _
    $region7: #{tpu_custom_call.1} parent=1 // pred_check_branch
      %26 = sbr.rel (0) target = $region9
    $region8: #{tpu_custom_call.1} parent=1 // pred_region
      %27 = dma.done [#allocation5], 48
    $region9: #{tpu_custom_call.1} parent=1 // pred_fallthru
      _
    %s28 = sld [smem:[#allocation3 + $0x3]]
    %s29 = sld [smem:[#allocation3]]
    %v30 = vld [vmem:[#allocation4] sm:$0x1]
    %v31 = vstv %s29
    %v32 = vmul.f32 %v31, %v30
    %v33 = vstv %s28
    %v34 = vadd.f32 %v33, %v32
    %s35 = sld [smem:[#allocation3 + $0x1]]
    %s36 = scalar_lea.vmem [#allocation4], 1
    %v37 = vld [vmem:[%s36] sm:$0x1]
    %v38 = vstv %s35
    %v39 = vmul.f32 %v38, %v37
    %v40 = vadd.f32 %v34, %v39
    %s41 = sld [smem:[#allocation3 + $0x2]]
    %s42 = scalar_lea.vmem [#allocation4], 2
    %v43 = vld [vmem:[%s42] sm:$0x1]
    %v44 = vstv %s41
    %v45 = vmul.f32 %v44, %v43
    %v46 = vadd.f32 %v40, %v45
    %v47 = vtanh.pop %v46
    %48 = vst [vmem:[#allocation7] sm:$0x1] %v47
    // Predicated region
    $region10: #{tpu_custom_call.1} parent=1 // pred_check
      _
    $region11: #{tpu_custom_call.1} parent=1 // pred_check_branch
      %50 = sbr.rel (0) target = $region13
    $region12: #{tpu_custom_call.1} parent=1 // pred_region
      %s52 = ssub.s32 16, 16
      %53 = vsyncadd [#allocation6], %s52
      %s55 = sshll.u32 [#allocation7], 4
      %s56 = int_to_ptr.vmem [resolvable:$true] %s55
      %58 = dma.vmem_to_hbm [thread:$0]  %s56, 16, %s2, [#allocation6]
    $region13: #{tpu_custom_call.1} parent=1 // pred_fallthru
      _
    // Predicated region
    $region14: #{tpu_custom_call.1} parent=1 // pred_check
      _
    $region15: #{tpu_custom_call.1} parent=1 // pred_check_branch
      %60 = sbr.rel (0) target = $region17
    $region16: #{tpu_custom_call.1} parent=1 // pred_region
      %61 = dma.done [#allocation6], 16
    $region17: #{tpu_custom_call.1} parent=1 // pred_fallthru
      _
    %62 = vsyncpa [#allocation5], 1
    %63 = vsyncpa [#allocation6], 1

</llo_original>
